<compile_context>
chip_gen: v7x
topology: tpu7x:2x2x1
jax: 0.10.0
libtpu: 0.0.40
codegen_flags: <defaults>
</compile_context>

<pallas_src>
import functools

import jax
import jax.numpy as jnp
from jax import lax
from jax.experimental import pallas as pl
from jax.experimental.pallas import tpu as pltpu


# finite "masked" value: avoids -inf -> NaN pathologies if a kv tile were ever fully padded
_NEG_BIG = float(jnp.finfo(jnp.float32).min) / 2.0


def _round_up(x, m):
    return ((x + m - 1) // m) * m


def _tiling_defaults(seq_tile, vmem_limit_bytes):
    """Per-TPU-generation tiling defaults (v5e/v6e: 128 MiB VMEM; v7x: 64 MiB per TC)."""
    if seq_tile is not None and vmem_limit_bytes is not None:
        return seq_tile, vmem_limit_bytes
    try:
        vmem_cap = pltpu.get_tpu_info().vmem_capacity_bytes
    except Exception:  # fall back to a budget that is safe on every generation
        vmem_cap = None
    if vmem_cap is not None and vmem_cap >= 100 * 1024 * 1024:
        st, vl = 512, 80 * 1024 * 1024          # v5e / v6e class: plenty of VMEM headroom
    else:
        st, vl = 256, 44 * 1024 * 1024          # v7x class (64 MiB/TC) or unknown: strict budget
    return (seq_tile if seq_tile is not None else st,
            vmem_limit_bytes if vmem_limit_bytes is not None else vl)


# --------------------------------------------------------------------------------------
# Pass 1: fused Q/K/V projection   qkv = x @ [Wq*scale | Wk | Wv] + [bq*scale | bk | bv]
# --------------------------------------------------------------------------------------
def _qkv_projection_kernel(x_ref, w_ref, b_ref, qkv_ref, *, compute_dtype):
    xt = x_ref[...].astype(compute_dtype)                                # (t, D_in) MXU dtype
    acc = jnp.dot(xt, w_ref[...], preferred_element_type=jnp.float32)    # (t, 3*d_pad) f32
    qkv_ref[...] = (acc + b_ref[...]).astype(qkv_ref.dtype)


# --------------------------------------------------------------------------------------
# Pass 2: flash attention over precomputed q/k/v tiles (online softmax across kv tiles)
# --------------------------------------------------------------------------------------
def _flash_attention_kernel(q_ref, k_ref, v_ref, o_ref, m_sc, l_sc, acc_sc,
                            *, kv_tile, kv_valid):
    ki = pl.program_id(2)
    last = pl.num_programs(2) - 1

    @pl.when(ki == 0)
    def _init():
        m_sc[...] = jnp.full(m_sc.shape, _NEG_BIG, dtype=m_sc.dtype)
        l_sc[...] = jnp.zeros(l_sc.shape, dtype=l_sc.dtype)
        acc_sc[...] = jnp.zeros(acc_sc.shape, dtype=acc_sc.dtype)

    # scores: contract last dim of q and k directly (NT form, no k.T materialization)
    s = lax.dot_general(q_ref[...], k_ref[...], (((1,), (1,)), ((), ())),
                        preferred_element_type=jnp.float32)              # (tq, tk) f32

    def _online_softmax_update(scores):
        m_prev = m_sc[...]
        m_new = jnp.maximum(m_prev, jnp.max(scores, axis=-1, keepdims=True))
        alpha = jnp.exp(m_prev - m_new)
        p = jnp.exp(scores - m_new)
        l_sc[...] = alpha * l_sc[...] + jnp.sum(p, axis=-1, keepdims=True)
        acc_sc[...] = alpha * acc_sc[...] + jnp.dot(
            p.astype(v_ref.dtype), v_ref[...], preferred_element_type=jnp.float32)
        m_sc[...] = m_new

    if kv_valid is None:
        # S is a tile multiple: masking statically elided everywhere.
        _online_softmax_update(s)
    else:
        # Only the last kv tile has padded columns -> pay the iota/compare/select VPU work
        # only there (two-path body per perf review).
        @pl.when(ki != last)
        def _unmasked():
            _online_softmax_update(s)

        @pl.when(ki == last)
        def _masked():
            col = ki * kv_tile + lax.broadcasted_iota(jnp.int32, s.shape, 1)
            _online_softmax_update(jnp.where(col < kv_valid, s, _NEG_BIG))

    @pl.when(ki == last)
    def _finalize():
        # exact divide: runs once per q tile, negligible cost, tighter numerics
        o_ref[...] = (acc_sc[...] / l_sc[...]).astype(o_ref.dtype)


def attention_head(x, wq, bq, wk, bk, wv, bv, *,
                   seq_tile=None, vmem_limit_bytes=None,
                   use_bf16_matmul=True, kv_buffers=2):
    """x: (B, S, D_in); w*: (D_in, D_out); b*: (D_out,) -> (B, S, D_out)."""
    B, S, D_in = x.shape
    D_out = wq.shape[1]
    scale = 1.0 / (float(D_out) ** 0.5)

    seq_tile, vmem_limit_bytes = _tiling_defaults(seq_tile, vmem_limit_bytes)
    compute_dtype = jnp.bfloat16 if use_bf16_matmul else x.dtype

    # ---- lane-dense head dim: zero-pad D_out up to a multiple of 128 ----
    d_pad = max(128, _round_up(D_out, 128))

    def _pad_w(w):
        return jnp.pad(w, ((0, 0), (0, d_pad - D_out))) if d_pad != D_out else w

    def _pad_b(b):
        return jnp.pad(b, (0, d_pad - D_out)) if d_pad != D_out else b

    # Fold 1/sqrt(D_out) into the Q projection and fuse all three projections into one
    # (D_in, 3*d_pad) weight so the projection GEMM has N >= 384 (fills the MXU).
    w_fused = jnp.concatenate(
        [_pad_w(wq * scale), _pad_w(wk), _pad_w(wv)], axis=1).astype(compute_dtype)
    b_fused = jnp.concatenate(
        [_pad_b(bq * scale), _pad_b(bk), _pad_b(bv)]).reshape(1, 3 * d_pad).astype(jnp.float32)

    # ---- sequence tiling (bounded VMEM, pipelining, online softmax over KV) ----
    t = min(seq_tile, _round_up(S, 8))
    s_pad = _round_up(S, t)
    if s_pad != S:
        x_p = jnp.pad(x, ((0, 0), (0, s_pad - S), (0, 0)))
        kv_valid = S
    else:
        x_p = x
        kv_valid = None
    n_seq = s_pad // t

    # ---- pass 1: fused QKV projection, computed once per token ----
    qkv = pl.pallas_call(
        functools.partial(_qkv_projection_kernel, compute_dtype=compute_dtype),
        out_shape=jax.ShapeDtypeStruct((B, s_pad, 3 * d_pad), compute_dtype),
        grid_spec=pltpu.PrefetchScalarGridSpec(
            num_scalar_prefetch=0,
            grid=(B, n_seq),
            in_specs=[pl.BlockSpec((None, t, D_in), lambda b, i: (b, i, 0)),
                      pl.BlockSpec((D_in, 3 * d_pad), lambda b, i: (0, 0)),
                      pl.BlockSpec((1, 3 * d_pad), lambda b, i: (0, 0))],
            out_specs=pl.BlockSpec((None, t, 3 * d_pad), lambda b, i: (b, i, 0))),
        compiler_params=pltpu.CompilerParams(
            dimension_semantics=("parallel", "parallel"),
            vmem_limit_bytes=vmem_limit_bytes),
    )(x_p, w_fused, b_fused)

    # ---- pass 2: flash attention; q/k/v are lane-aligned column blocks of the qkv tensor ----
    kv_kwargs = {} if kv_buffers == 2 else {"pipeline_mode": pl.Buffered(kv_buffers)}
    q_spec = pl.BlockSpec((None, t, d_pad), lambda b, qi, ki: (b, qi, 0))
    k_spec = pl.BlockSpec((None, t, d_pad), lambda b, qi, ki: (b, ki, 1), **kv_kwargs)
    v_spec = pl.BlockSpec((None, t, d_pad), lambda b, qi, ki: (b, ki, 2), **kv_kwargs)
    o_spec = pl.BlockSpec((None, t, d_pad), lambda b, qi, ki: (b, qi, 0))

    out = pl.pallas_call(
        functools.partial(_flash_attention_kernel, kv_tile=t, kv_valid=kv_valid),
        out_shape=jax.ShapeDtypeStruct((B, s_pad, d_pad), x.dtype),
        grid_spec=pltpu.PrefetchScalarGridSpec(
            num_scalar_prefetch=0,
            grid=(B, n_seq, n_seq),
            in_specs=[q_spec, k_spec, v_spec],
            out_specs=o_spec,
            scratch_shapes=[
                pltpu.VMEM((t, 1), jnp.float32),      # running max m
                pltpu.VMEM((t, 1), jnp.float32),      # running denom l
                pltpu.VMEM((t, d_pad), jnp.float32),  # output accumulator
            ]),
        compiler_params=pltpu.CompilerParams(
            dimension_semantics=("parallel", "parallel", "arbitrary"),
            vmem_limit_bytes=vmem_limit_bytes),
    )(qkv, qkv, qkv)

    return out[:, :S, :D_out]


def _reference(x, wq, bq, wk, bk, wv, bv):
    q = x @ wq + bq
    k = x @ wk + bk
    v = x @ wv + bv
    s = jnp.einsum("bqd,bkd->bqk", q, k) / jnp.sqrt(jnp.asarray(wq.shape[1], x.dtype))
    p = jax.nn.softmax(s, axis=-1)
    return jnp.einsum("bqk,bkd->bqd", p, v)


if __name__ == "__main__":
    B, S, D_in, D_out = 2, 8, 32, 16

    key = jax.random.PRNGKey(0)
    kx, kwq, kbq, kwk, kbk, kwv, kbv = jax.random.split(key, 7)

    lim = 1.0 / (D_in ** 0.5)
    x = jax.random.normal(kx, (B, S, D_in), dtype=jnp.float32)
    wq = jax.random.uniform(kwq, (D_in, D_out), jnp.float32, -lim, lim)
    bq = jax.random.uniform(kbq, (D_out,), jnp.float32, -lim, lim)
    wk = jax.random.uniform(kwk, (D_in, D_out), jnp.float32, -lim, lim)
    bk = jax.random.uniform(kbk, (D_out,), jnp.float32, -lim, lim)
    wv = jax.random.uniform(kwv, (D_in, D_out), jnp.float32, -lim, lim)
    bv = jax.random.uniform(kbv, (D_out,), jnp.float32, -lim, lim)

    ref = _reference(x, wq, bq, wk, bk, wv, bv)

    # Default (performance) configuration: bf16 MXU operands, f32 accumulation.
    out = attention_head(x, wq, bq, wk, bk, wv, bv)
    out = jax.block_until_ready(out)
    assert out.shape == (B, S, D_out)
    # tolerance dominated by bf16 operand rounding (per perf-review numerics contract)
    assert jnp.allclose(out, ref, atol=5e-2, rtol=5e-2), "bf16 kernel mismatch vs reference"

    # Full-precision operand configuration: verifies the algorithm (flash online softmax,
    # tiling, padding, fused/scale-folded projection) tightly against the reference.
    out_f32 = attention_head(x, wq, bq, wk, bk, wv, bv, use_bf16_matmul=False)
    out_f32 = jax.block_until_ready(out_f32)
    assert jnp.allclose(out_f32, ref, atol=2e-3, rtol=2e-3), "f32 kernel mismatch vs reference"

    print("KERNEL_OK")
</pallas_src>

<mosaic_0001>
module attributes {stable_mosaic.version = 11 : i64} {
  func.func @_qkv_projection_kernel(%arg0: i32, %arg1: i32, %arg2: memref<1x8x32xf32, #tpu.memory_space<vmem>>, %arg3: memref<32x384xbf16, #tpu.memory_space<vmem>>, %arg4: memref<1x384xf32, #tpu.memory_space<vmem>>, %arg5: memref<1x8x384xbf16, #tpu.memory_space<vmem>>) attributes {dimension_semantics = [#tpu.dimension_semantics<parallel>, #tpu.dimension_semantics<parallel>], iteration_bounds = array<i64: 2, 1>, scalar_prefetch = 0 : i64, scratch_operands = 0 : i64, tpu.core_type = #tpu.core_type<tc>, window_params = [{transform_indices = @transform_0, window_bounds = array<i64: 1, 8, 32>}, {pipeline_mode = #tpu.pipeline_mode<synchronous>, transform_indices = @transform_1, window_bounds = array<i64: 32, 384>}, {pipeline_mode = #tpu.pipeline_mode<synchronous>, transform_indices = @transform_2, window_bounds = array<i64: 1, 384>}, {transform_indices = @transform_3, window_bounds = array<i64: 1, 8, 384>}]} {
    %c0 = arith.constant 0 : index
    %c0_0 = arith.constant 0 : index
    %c0_1 = arith.constant 0 : index
    %0 = vector.load %arg2[%c0, %c0_0, %c0_1] : memref<1x8x32xf32, #tpu.memory_space<vmem>>, vector<1x8x32xf32>
    %1 = vector.shape_cast %0 : vector<1x8x32xf32> to vector<8x32xf32>
    %2 = arith.truncf %1 : vector<8x32xf32> to vector<8x32xbf16>
    %c0_2 = arith.constant 0 : index
    %c0_3 = arith.constant 0 : index
    %3 = vector.load %arg3[%c0_2, %c0_3] : memref<32x384xbf16, #tpu.memory_space<vmem>>, vector<32x384xbf16>
    %cst = arith.constant dense<0.000000e+00> : vector<8x384xf32>
    %4 = tpu.matmul %2, %3, %cst {dimension_numbers = #tpu.dot_dimension_numbers<[1], [0], [0], [1], [0, 0, 1, 1], [], []>} : vector<8x32xbf16>, vector<32x384xbf16>, vector<8x384xf32> -> vector<8x384xf32>
    %c0_4 = arith.constant 0 : index
    %c0_5 = arith.constant 0 : index
    %5 = vector.load %arg4[%c0_4, %c0_5] : memref<1x384xf32, #tpu.memory_space<vmem>>, vector<1x384xf32>
    %6 = vector.broadcast %5 : vector<1x384xf32> to vector<8x384xf32>
    %7 = arith.addf %4, %6 : vector<8x384xf32>
    %8 = arith.truncf %7 : vector<8x384xf32> to vector<8x384xbf16>
    %c0_6 = arith.constant 0 : index
    %c0_7 = arith.constant 0 : index
    %c0_8 = arith.constant 0 : index
    %9 = vector.load %arg5[%c0_6, %c0_7, %c0_8] : memref<1x8x384xbf16, #tpu.memory_space<vmem>>, vector<1x8x384xbf16>
    %10 = vector.shape_cast %9 : vector<1x8x384xbf16> to vector<8x384xbf16>
    %11 = vector.shape_cast %8 : vector<8x384xbf16> to vector<1x8x384xbf16>
    tpu.vector_store %arg5[%c0_6, %c0_7, %c0_8], %11 {strides = array<i32>} : memref<1x8x384xbf16, #tpu.memory_space<vmem>>, vector<1x8x384xbf16>,
    return
  }
  func.func @transform_0(%arg0: i32, %arg1: i32) -> (i32, i32, i32) {
    %c0_i32 = arith.constant 0 : i32
    %c0_i32_0 = arith.constant 0 : i32
    return %arg0, %arg1, %c0_i32 : i32, i32, i32
  }
  func.func @transform_1(%arg0: i32, %arg1: i32) -> (i32, i32) {
    %c0_i32 = arith.constant 0 : i32
    %c0_i32_0 = arith.constant 0 : i32
    %c0_i32_1 = arith.constant 0 : i32
    return %c0_i32, %c0_i32_0 : i32, i32
  }
  func.func @transform_2(%arg0: i32, %arg1: i32) -> (i32, i32) {
    %c0_i32 = arith.constant 0 : i32
    %c0_i32_0 = arith.constant 0 : i32
    %c0_i32_1 = arith.constant 0 : i32
    return %c0_i32, %c0_i32_0 : i32, i32
  }
  func.func @transform_3(%arg0: i32, %arg1: i32) -> (i32, i32, i32) {
    %c0_i32 = arith.constant 0 : i32
    %c0_i32_0 = arith.constant 0 : i32
    return %arg0, %arg1, %c0_i32 : i32, i32, i32
  }
}

</mosaic_0001>

<llo_original>
// kernel: tpu_custom_call.1
$region0: #{tpu_custom_call.1}
  #allocation0 [shape = 'u32[]', space=smem, size = 0x4, offset = 0x4, fixed_abs, tag = 'smem constant byte address 0x4 - core index']
  #allocation1 [shape = 'u32[144,128]{1,0:T(1,128)}', space=vmem, size = 0x12000, scoped, tag = 'internal scratch']
  %s0 = inlined_call_operand.hbm [shape: f32[2,8,32], index: 0, kind: input, shape index: {}]
  %s1 = inlined_call_operand.hbm [shape: bf16[32,384], index: 1, kind: input, shape index: {}]
  %s2 = inlined_call_operand.vmem [shape: f32[1,384], index: 2, kind: input, shape index: {}]
  %s3 = inlined_call_operand.hbm [shape: bf16[2,8,384], index: 3, kind: output, shape index: {}]
  %s4 = sld [smem:[#allocation0]]
  $region53: #{tpu_custom_call.1} parent=0
    _
  %s6 = ssub.s32 1, %s4
  %s7 = scalar_select 0, %s6, %s4
  $region1: #{tpu_custom_call.1} parent=0
    #allocation2 [shape = 'u8[8192]{0}', space=vmem, size = 0x2000, scoped, tag = 'input window, operand 0']
    #allocation3 [shape = 's32[2]{0}', space=sflag, size = 0x8, scoped, tag = 'scoped memory for tpu_custom_call.1']
    #allocation4 [shape = 's32[2]{0}', space=sflag, size = 0x8, scoped, tag = 'scoped memory for tpu_custom_call.1']
    #allocation5 [shape = 'u8[24576]{0}', space=vmem, size = 0x6000, scoped, tag = 'input window, operand 1, single buffered']
    #allocation6 [shape = 's32[1]{0}', space=sflag, size = 0x4, scoped, tag = 'scoped memory for tpu_custom_call.1']
    #allocation7 [shape = 'u8[12288]{0}', space=vmem, size = 0x3000, scoped, tag = 'output window, operand 0']
    %8 = vsyncpa [#allocation3], 0
    %s9 = scalar_lea.sflag [#allocation3], 1
    %10 = vsyncpa %s9, 0
    %11 = vsyncpa [#allocation6], 0
    %12 = vsyncpa [#allocation4], 0
    %s13 = scalar_lea.sflag [#allocation4], 1
    %14 = vsyncpa %s13, 0
    loop: start=0, step=1, limit=4
    $region2: #{tpu_custom_call.1} parent=1 // loop_pre_header
      _
    $region3: #{tpu_custom_call.1} parent=1 // loop_header
      %s16 = sphi 0, %s20
      %p17 = scmp.ge.s32.totalorder %s16, 4
      %s23 = sphi 0, %s35
      %s24 = sphi 0, %s31
      %s25 = sphi 0, %s23
      %s26 = sphi 0, %s24
      %s27 = sphi 0, %s25
      %s28 = sphi 0, %s26
      %s40 = sphi 0, %s42
      %s43 = sphi 0, %s40
      %s44 = sphi 0, %s43
      %s60 = sphi 0, %s44
      %s64 = sphi 0, %s64
      %s66 = sphi 0, %s64
      %s67 = sphi 0, %s66
      %s81 = sphi 0, %s67
      %s85 = sphi 0, %s85
      %s87 = sphi 0, %s85
      %s88 = sphi 0, %s87
      %s102 = sphi 0, %s88
      %s110 = sphi 0, %s112
      %s113 = sphi 0, %s110
      %s114 = sphi 0, %s113
      %s130 = sphi 0, %s114
    $region4: #{tpu_custom_call.1} parent=1 // loop_header_branch
      %19 = sbr.rel (%p17) target = $region8
    $region5: #{tpu_custom_call.1} parent=1 // loop_body
      %s21 = ssub.s32 %s16, 1
      %s22 = ssub.s32 %s16, 2
      %s29 = sadd.s32 1, %s24
      %p30 = scmp.ge.s32.totalorder %s29, 1
      %s31 = scalar_select %p30, 0, %s29
      %s32 = sadd.s32 1, %s23
      %s33 = scalar_select %p30, %s32, %s23
      %p34 = scmp.ge.s32.totalorder %s33, 2
      %s35 = scalar_select %p34, 0, %s33
      %s36 = ssub.s32 %s23, %s35
      %s37 = ssub.s32 %s24, %s31
      %s38 = sor.u32 %s36, %s37
      %p39 = scmp.eq.s32.totalorder %s38, 0
      %s41 = sadd.s32 %s40, 1
      %s42 = scalar_select %p39, %s40, %s41
      %p45 = pneg %p39
      %p46 = scmp.eq.s32.totalorder %s16, 1
      %p47 = por %p45, %p46
      %p48 = scmp.ne.s32.totalorder %s40, %s43
      %p49 = scmp.eq.s32.totalorder %s16, 0
      %p50 = por %p48, %p49
      %p51 = scmp.ne.s32.totalorder %s40, %s43
      %p52 = scmp.eq.s32.totalorder %s21, 1
      %p53 = por %p51, %p52
      %p54 = scmp.ne.s32.totalorder %s43, %s44
      %p55 = scmp.eq.s32.totalorder %s21, 0
      %p56 = por %p54, %p55
      %p57 = scmp.ne.s32.totalorder %s43, %s44
      %p58 = scmp.eq.s32.totalorder %s22, 1
      %p59 = por %p57, %p58
      %p61 = scmp.ne.s32.totalorder %s44, %s60
      %p62 = scmp.eq.s32.totalorder %s22, 0
      %p63 = por %p61, %p62
      %s65 = sadd.s32 %s64, 1
      %p68 = scmp.eq.s32.totalorder %s16, 1
      %p69 = scmp.ne.s32.totalorder %s64, %s66
      %p70 = scmp.eq.s32.totalorder %s16, 0
      %p71 = por %p69, %p70
      %p72 = scmp.ne.s32.totalorder %s64, %s66
      %p73 = scmp.eq.s32.totalorder %s21, 1
      %p74 = por %p72, %p73
      %p75 = scmp.ne.s32.totalorder %s66, %s67
      %p76 = scmp.eq.s32.totalorder %s21, 0
      %p77 = por %p75, %p76
      %p78 = scmp.ne.s32.totalorder %s66, %s67
      %p79 = scmp.eq.s32.totalorder %s22, 1
      %p80 = por %p78, %p79
      %p82 = scmp.ne.s32.totalorder %s67, %s81
      %p83 = scmp.eq.s32.totalorder %s22, 0
      %p84 = por %p82, %p83
      %s86 = sadd.s32 %s85, 1
      %p89 = scmp.eq.s32.totalorder %s16, 1
      %p90 = scmp.ne.s32.totalorder %s85, %s87
      %p91 = scmp.eq.s32.totalorder %s16, 0
      %p92 = por %p90, %p91
      %p93 = scmp.ne.s32.totalorder %s85, %s87
      %p94 = scmp.eq.s32.totalorder %s21, 1
      %p95 = por %p93, %p94
      %p96 = scmp.ne.s32.totalorder %s87, %s88
      %p97 = scmp.eq.s32.totalorder %s21, 0
      %p98 = por %p96, %p97
      %p99 = scmp.ne.s32.totalorder %s87, %s88
      %p100 = scmp.eq.s32.totalorder %s22, 1
      %p101 = por %p99, %p100
      %p103 = scmp.ne.s32.totalorder %s88, %s102
      %p104 = scmp.eq.s32.totalorder %s22, 0
      %p105 = por %p103, %p104
      %s106 = ssub.s32 %s23, %s35
      %s107 = ssub.s32 %s24, %s31
      %s108 = sor.u32 %s106, %s107
      %p109 = scmp.eq.s32.totalorder %s108, 0
      %s111 = sadd.s32 %s110, 1
      %s112 = scalar_select %p109, %s110, %s111
      %p115 = pneg %p109
      %p116 = scmp.eq.s32.totalorder %s16, 1
      %p117 = por %p115, %p116
      %p118 = scmp.ne.s32.totalorder %s110, %s113
      %p119 = scmp.eq.s32.totalorder %s16, 0
      %p120 = por %p118, %p119
      %p121 = scmp.ne.s32.totalorder %s110, %s113
      %p122 = scmp.eq.s32.totalorder %s21, 1
      %p123 = por %p121, %p122
      %p124 = scmp.ne.s32.totalorder %s113, %s114
      %p125 = scmp.eq.s32.totalorder %s21, 0
      %p126 = por %p124, %p125
      %p127 = scmp.ne.s32.totalorder %s113, %s114
      %p128 = scmp.eq.s32.totalorder %s22, 1
      %p129 = por %p127, %p128
      %p131 = scmp.ne.s32.totalorder %s114, %s130
      %p132 = scmp.eq.s32.totalorder %s22, 0
      %p133 = por %p131, %p132
      %p134 = scmp.le.s32.totalorder 1, %s16
      %p135 = scmp.lt.s32.totalorder %s16, 3
      %p136 = pnand %p134, %p135
      %p137 = pneg %p136
      // Predicated region
      $region9: #{tpu_custom_call.1} parent=5 // pred_check
        _
      $region10: #{tpu_custom_call.1} parent=5 // pred_check_branch
        %139 = sbr.rel (%p136) target = $region12
      $region11: #{tpu_custom_call.1} parent=5 // pred_region
        %s140 = ssub.s32 %s16, 1
        // Predicated region
        $region13: #{tpu_custom_call.1} parent=11 // pred_check
          %p141 = pneg %p77
        $region14: #{tpu_custom_call.1} parent=11 // pred_check_branch
          %143 = sbr.rel (%p141) target = $region16
        $region15: #{tpu_custom_call.1} parent=11 // pred_region
          %s145 = ssub.s32 768, 768
          %146 = vsyncadd [#allocation6], %s145
          %s147 = sshll.u32 [#allocation5], 4
          %s148 = int_to_ptr.vmem [resolvable:$true] %s147
          %153 = dma.hbm_to_vmem [thread:$0]  %s1, 768, %s148, [#allocation6], 192, 192, 12
        $region16: #{tpu_custom_call.1} parent=11 // pred_fallthru
          _
        // Predicated region
        $region17: #{tpu_custom_call.1} parent=11 // pred_check
          %p154 = pneg %p98
        $region18: #{tpu_custom_call.1} parent=11 // pred_check_branch
          %156 = sbr.rel (%p154) target = $region20
        $region19: #{tpu_custom_call.1} parent=11 // pred_region
          _
        $region20: #{tpu_custom_call.1} parent=11 // pred_fallthru
          _
      $region12: #{tpu_custom_call.1} parent=5 // pred_fallthru
        _
      %p157 = scmp.lt.s32.totalorder %s16, 2
      // Predicated region
      $region21: #{tpu_custom_call.1} parent=5 // pred_check
        %p158 = pneg %p157
      $region22: #{tpu_custom_call.1} parent=5 // pred_check_branch
        %160 = sbr.rel (%p158) target = $region24
      $region23: #{tpu_custom_call.1} parent=5 // pred_region
        // Predicated region
        $region25: #{tpu_custom_call.1} parent=23 // pred_check
          %p161 = pneg %p50
        $region26: #{tpu_custom_call.1} parent=23 // pred_check_branch
          %163 = sbr.rel (%p161) target = $region28
        $region27: #{tpu_custom_call.1} parent=23 // pred_region
          %s164 = sand.u32 %s40, 1
          %s165 = scalar_lea.sflag [#allocation3], %s164
          %s166 = sand.u32 %s40, 1
          %s167 = smul.addr %s166, 8
          %s168 = scalar_lea.vmem [#allocation2], %s167
          %s170 = ssub.s32 128, 128
          %171 = vsyncadd %s165, %s170
          %s172 = sadd.s32 %s24, %s23
          %s173 = smul.addr %s172, 128
          %s174 = scalar_lea.hbm %s0, %s173
          %s176 = sshll.u32 %s168, 4
          %s177 = int_to_ptr.vmem [resolvable:$true] %s176
          %179 = dma.hbm_to_vmem [thread:$0]  %s174, 128, %s177, %s165
        $region28: #{tpu_custom_call.1} parent=23 // pred_fallthru
          _
      $region24: #{tpu_custom_call.1} parent=5 // pred_fallthru
        _
      %p180 = scmp.le.s32.totalorder 1, %s16
      %p181 = scmp.lt.s32.totalorder %s16, 3
      %p182 = pnand %p180, %p181
      %p183 = pneg %p182
      // Predicated region
      $region29: #{tpu_custom_call.1} parent=5 // pred_check
        _
      $region30: #{tpu_custom_call.1} parent=5 // pred_check_branch
        %185 = sbr.rel (%p182) target = $region32
      $region31: #{tpu_custom_call.1} parent=5 // pred_region
        %s186 = ssub.s32 %s16, 1
        %s187 = sand.u32 %s43, 1
        %s188 = scalar_lea.sflag [#allocation3], %s187
        %s189 = sand.u32 %s43, 1
        %s190 = smul.addr %s189, 8
        %s191 = scalar_lea.vmem [#allocation2], %s190
        // Predicated region
        $region33: #{tpu_custom_call.1} parent=31 // pred_check
          %p192 = pneg %p56
        $region34: #{tpu_custom_call.1} parent=31 // pred_check_branch
          %194 = sbr.rel (%p192) target = $region36
        $region35: #{tpu_custom_call.1} parent=31 // pred_region
          %195 = dma.done %s188, 128
        $region36: #{tpu_custom_call.1} parent=31 // pred_fallthru
          _
        // Predicated region
        $region37: #{tpu_custom_call.1} parent=31 // pred_check
          %p196 = pneg %p77
        $region38: #{tpu_custom_call.1} parent=31 // pred_check_branch
          %198 = sbr.rel (%p196) target = $region40
        $region39: #{tpu_custom_call.1} parent=31 // pred_region
          %199 = dma.done [#allocation6], 768
        $region40: #{tpu_custom_call.1} parent=31 // pred_fallthru
          _
        %s200 = sand.u32 %s43, 1
        %s201 = scalar_lea.sflag [#allocation3], %s200
        %s202 = sand.u32 %s43, 1
        %s203 = smul.addr %s202, 8
        %s204 = scalar_lea.vmem [#allocation2], %s203
        %p205 = pneg %p56
        %p206 = pneg %p53
        %p207 = pneg %p77
        %p208 = pneg %p74
        %p209 = pneg %p98
        %p210 = pneg %p95
        %p211 = pneg %p126
        %p212 = pneg %p123
        %s213 = sand.u32 %s113, 1
        %s214 = scalar_lea.sflag [#allocation4], %s213
        %s215 = sand.u32 %s113, 1
        %s216 = smul.addr %s215, 12
        %s217 = scalar_lea.vmem [#allocation7], %s216
        %v219 = vld [vmem:[%s191] sm:$0xff]
        %v220 = vpack.c.bf16 %v219, %v219
        %v221 = vld [vmem:[#allocation5] sm:$0xff]
        %v222 = vld [vmem:[#allocation5 + $0x8] sm:$0xf]
        %v223 = vld [vmem:[#allocation5 + $0xc] sm:$0xff]
        %v224 = vld [vmem:[#allocation5 + $0x14] sm:$0xf]
        %v225 = vld [vmem:[#allocation5 + $0x18] sm:$0xff]
        %v226 = vld [vmem:[#allocation5 + $0x20] sm:$0xf]
        %v227 = vld [vmem:[#allocation5 + $0x24] sm:$0xff]
        %v228 = vld [vmem:[#allocation5 + $0x2c] sm:$0xf]
        %v229 = vld [vmem:[%s2] sm:$0x7]
        %v231 = vlaneseq
        %v232 = vshrl.u32 %v231, 7
        %v233 = vsub.s32 0, %v232
        %v234 = vrot.slane %v229, %v233
        %v235 = vlaneseq
        %v236 = vshrl.u32 %v235, 7
        %v237 = vsub.s32 1, %v236
        %v238 = vrot.slane %v229, %v237
        %v239 = vlaneseq
        %v240 = vshrl.u32 %v239, 7
        %v241 = vsub.s32 2, %v240
        %v242 = vrot.slane %v229, %v241
        %v254 = vunpack.c.l.b16 %v221
        %v255 = vunpack.c.h.b16 %v221
        %v256 = vunpack.c.l.b16 %v222
        %v257 = vunpack.c.l.b16 %v223
        %v258 = vunpack.c.h.b16 %v223
        %v259 = vunpack.c.l.b16 %v224
        %v260 = vunpack.c.l.b16 %v225
        %v261 = vunpack.c.h.b16 %v225
        %v262 = vunpack.c.l.b16 %v226
        %v263 = vunpack.c.l.b16 %v227
        %v264 = vunpack.c.h.b16 %v227
        %v265 = vunpack.c.l.b16 %v228
        %v266 = vpack.c.b16 %v257, %v254
        %v267 = vpack.c.b16 %v258, %v255
        %v268 = vpack.c.b16 %v259, %v256
        %v269 = vpack.c.b16 %v263, %v260
        %v270 = vpack.c.b16 %v264, %v261
        %v271 = vpack.c.b16 %v265, %v262
        %vm278 = vcmask 261120
        %v280 = vsel %vm278, %v220, 0
        %282 = vmatprep.subr.bf16.mxu0 %v267
        %283 = vmatpush1.bf16.msra.mxu0 %v266
        %284 = vmatprep.subr.bf16.mxu0 %v270
        %285 = vmatpush1.bf16.msra.mxu0 %v269
        %286 = vmatprep.subr.bf16.mxu0 0
        %287 = vmatpush1.bf16.msra.mxu0 0
        %288 = vmatprep.subr.bf16.mxu0 0
        %289 = vmatpush1.bf16.msra.mxu0 0
        %290 = vmatprep.subr.bf16.mxu0 0
        %291 = vmatpush1.bf16.msra.mxu0 0
        %292 = vmatprep.subr.bf16.mxu0 0
        %293 = vmatpush1.bf16.msra.mxu0 0
        %294 = vmatprep.subr.bf16.mxu0 0
        %295 = vmatpush1.bf16.msra.mxu0 0
        %296 = vmatprep.subr.bf16.mxu0 0
        %297 = vmatpush1.bf16.msra.mxu0 0
        %298 = vmatprep.subr.bf16.mxu0 0
        %299 = vmatpush1.bf16.msra.mxu0 0
        %300 = vmatprep.subr.bf16.mxu0 0
        %301 = vmatpush1.bf16.msra.mxu0 0
        %302 = vmatprep.subr.bf16.mxu0 0
        %303 = vmatpush1.bf16.msra.mxu0 0
        %304 = vmatprep.subr.bf16.mxu0 0
        %305 = vmatpush1.bf16.msra.mxu0 0
        %306 = vmatprep.subr.bf16.mxu0 0
        %307 = vmatpush1.bf16.msra.mxu0 0
        %308 = vmatprep.subr.bf16.mxu0 0
        %309 = vmatpush1.bf16.msra.mxu0 0
        %310 = vmatprep.subr.bf16.mxu0 0
        %311 = vmatpush1.bf16.msra.mxu0 0
        %312 = vmatprep.subr.bf16.mxu0 0
        %313 = vmatpush1.bf16.msra.mxu0 0
        %314 = vmatprep.mubr.bf16.mxu0 0
        %315 = vmatmul.mubr.bf16.gmra.mrb[0].mxu0 %v280
        %v316 = vpop.f32.mrb[0].mxu0
        %v317 = vadd.f32 %v234, %v316
        %v318 = vpop.f32.mrb[0].mxu0
        %v319 = vadd.f32 %v238, %v318
        %v320 = vpop.f32.mrb[0].mxu0
        %v321 = vpop.f32.mrb[0].mxu0
        %322 = vdwg.mxu0
        %323 = vmatprep.subr.bf16.mxu0 0
        %324 = vmatpush1.bf16.msra.mxu0 %v268
        %325 = vmatprep.subr.bf16.mxu0 0
        %326 = vmatpush1.bf16.msra.mxu0 %v271
        %327 = vmatprep.subr.bf16.mxu0 0
        %328 = vmatpush1.bf16.msra.mxu0 0
        %329 = vmatprep.subr.bf16.mxu0 0
        %330 = vmatpush1.bf16.msra.mxu0 0
        %331 = vmatprep.subr.bf16.mxu0 0
        %332 = vmatpush1.bf16.msra.mxu0 0
        %333 = vmatprep.subr.bf16.mxu0 0
        %334 = vmatpush1.bf16.msra.mxu0 0
        %335 = vmatprep.subr.bf16.mxu0 0
        %336 = vmatpush1.bf16.msra.mxu0 0
        %337 = vmatprep.subr.bf16.mxu0 0
        %338 = vmatpush1.bf16.msra.mxu0 0
        %339 = vmatprep.subr.bf16.mxu0 0
        %340 = vmatpush1.bf16.msra.mxu0 0
        %341 = vmatprep.subr.bf16.mxu0 0
        %342 = vmatpush1.bf16.msra.mxu0 0
        %343 = vmatprep.subr.bf16.mxu0 0
        %344 = vmatpush1.bf16.msra.mxu0 0
        %345 = vmatprep.subr.bf16.mxu0 0
        %346 = vmatpush1.bf16.msra.mxu0 0
        %347 = vmatprep.subr.bf16.mxu0 0
        %348 = vmatpush1.bf16.msra.mxu0 0
        %349 = vmatprep.subr.bf16.mxu0 0
        %350 = vmatpush1.bf16.msra.mxu0 0
        %351 = vmatprep.subr.bf16.mxu0 0
        %352 = vmatpush1.bf16.msra.mxu0 0
        %353 = vmatprep.subr.bf16.mxu0 0
        %354 = vmatpush1.bf16.msra.mxu0 0
        %355 = vmatprep.mubr.bf16.mxu0 0
        %356 = vmatmul.mubr.bf16.gmra.mrb[0].mxu0 %v280
        %v357 = vpop.f32.mrb[0].mxu0
        %v358 = vadd.f32 %v242, %v357
        %v359 = vpop.f32.mrb[0].mxu0
        %v360 = vpop.f32.mrb[0].mxu0
        %v361 = vpop.f32.mrb[0].mxu0
        %362 = vdwg.mxu0
        %v363 = vpack.c.bf16 %v317, %v317
        %v364 = vpack.c.bf16 %v319, %v319
        %v365 = vpack.c.bf16 %v358, %v358
        %v369 = vunpack.c.l.b16 %v363
        %v370 = vunpack.c.l.b16 %v364
        %v371 = vunpack.c.l.b16 %v365
        %v372 = vpack.c.b16 %v370, %v369
        %v373 = vpack.c.b16 %v371, %v371
        %376 = vst [vmem:[%s217] sm:$0xff] %v372
        %377 = vst [vmem:[%s217 + $0x8] sm:$0xf] %v373
        %s378 = sand.u32 %s113, 1
        %s379 = scalar_lea.sflag [#allocation4], %s378
        %s380 = sand.u32 %s113, 1
        %s381 = smul.addr %s380, 12
        %s382 = scalar_lea.vmem [#allocation7], %s381
        // Predicated region
        $region41: #{tpu_custom_call.1} parent=31 // pred_check
          %p383 = pneg %p123
        $region42: #{tpu_custom_call.1} parent=31 // pred_check_branch
          %385 = sbr.rel (%p383) target = $region44
        $region43: #{tpu_custom_call.1} parent=31 // pred_region
          %s387 = ssub.s32 192, 192
          %388 = vsyncadd %s379, %s387
          %s389 = smul.addr %s26, 3
          %s390 = smul.addr %s25, 3
          %s391 = sadd.s32 %s389, %s390
          %s392 = smul.addr %s391, 64
          %s393 = scalar_lea.hbm %s3, %s392
          %s395 = sshll.u32 %s382, 4
          %s396 = int_to_ptr.vmem [resolvable:$true] %s395
          %398 = dma.vmem_to_hbm [thread:$0]  %s396, 192, %s393, %s379
        $region44: #{tpu_custom_call.1} parent=31 // pred_fallthru
          _
      $region32: #{tpu_custom_call.1} parent=5 // pred_fallthru
        _
      %p399 = scmp.le.s32.totalorder 2, %s16
      // Predicated region
      $region45: #{tpu_custom_call.1} parent=5 // pred_check
        %p400 = pneg %p399
      $region46: #{tpu_custom_call.1} parent=5 // pred_check_branch
        %402 = sbr.rel (%p400) target = $region48
      $region47: #{tpu_custom_call.1} parent=5 // pred_region
        %s403 = ssub.s32 %s16, 2
        // Predicated region
        $region49: #{tpu_custom_call.1} parent=47 // pred_check
          %p404 = pneg %p129
        $region50: #{tpu_custom_call.1} parent=47 // pred_check_branch
          %406 = sbr.rel (%p404) target = $region52
        $region51: #{tpu_custom_call.1} parent=47 // pred_region
          %s407 = sand.u32 %s114, 1
          %s408 = scalar_lea.sflag [#allocation4], %s407
          %s409 = sand.u32 %s114, 1
          %s410 = smul.addr %s409, 12
          %s411 = scalar_lea.vmem [#allocation7], %s410
          %412 = dma.done %s408, 192
        $region52: #{tpu_custom_call.1} parent=47 // pred_fallthru
          _
      $region48: #{tpu_custom_call.1} parent=5 // pred_fallthru
        _
    $region6: #{tpu_custom_call.1} parent=1 // loop_footer
      %s20 = sadd.s32 1, %s16
    $region7: #{tpu_custom_call.1} parent=1 // loop_footer_branch
      %15 = sbr.rel target = $region3
    $region8: #{tpu_custom_call.1} parent=1 // loop_exit
      _
    %413 = vsyncpa [#allocation3], 1
    %s414 = scalar_lea.sflag [#allocation3], 1
    %415 = vsyncpa %s414, 1
    %416 = vsyncpa [#allocation6], 1
    %417 = vsyncpa [#allocation4], 1
    %s418 = scalar_lea.sflag [#allocation4], 1
    %419 = vsyncpa %s418, 1

</llo_original>
